<compile_context>
chip_gen: v6e
topology: v6e:2x2x1
jax: 0.10.0
libtpu: 0.0.40
codegen_flags: <defaults>
</compile_context>

<pallas_src>
import functools

import jax
import jax.numpy as jnp
from jax.experimental import pallas as pl
from jax.experimental.pallas import tpu as pltpu


def _round_up(x: int, m: int) -> int:
    return -(-x // m) * m


def _mlp_fused_kernel(x_ref, *refs, num_layers: int):
    """Fused MLP: refs = (w0, b0, w1, b1, ..., w_{L-1}, b_{L-1}, o_ref).

    x:[TB, Din], w_l:[D_l, D_{l+1}], b_l:[1, D_{l+1}].  Hidden layers use
    ReLU; the output layer is linear (output_nonlinearity=None).
    All matmuls accumulate in f32 on the MXU; activations stay in vregs.
    """
    o_ref = refs[-1]
    h = x_ref[...]
    for layer in range(num_layers):
        w = refs[2 * layer][...]
        b = refs[2 * layer + 1][...]
        h = jnp.dot(h, w, preferred_element_type=jnp.float32) + b
        if layer < num_layers - 1:
            h = jnp.maximum(h, 0.0)
        # TODO(synk): layer_normalization branch not implemented (default
        # False; the PyTorch version also re-creates an untrained LayerNorm
        # each call).
    o_ref[...] = h.astype(o_ref.dtype)


def init_mlp_params(key, input_dim, output_dim, hidden_sizes):
    """Xavier-normal weights, zero biases (matches hidden/output inits).

    Weights stored as (in, out) so the kernel computes x @ W directly;
    biases stored as (1, out) so no reshape is needed in the hot path.
    """
    params = []
    prev = input_dim
    sizes = list(hidden_sizes) + [output_dim]
    for size in sizes:
        key, sub = jax.random.split(key)
        std = (2.0 / (prev + size)) ** 0.5
        w = std * jax.random.normal(sub, (prev, size), dtype=jnp.float32)
        b = jnp.zeros((1, size), dtype=jnp.float32)
        params.append((w, b))
        prev = size
    return params


def mlp_forward(params, input_val):
    """Forward pass matching MLP.forward (hidden ReLU, linear output,
    layer_normalization=False), fused into one Pallas kernel."""
    B = input_val.shape[0]
    x = jnp.asarray(input_val, jnp.float32).reshape(B, -1)
    din = x.shape[1]
    dout = params[-1][0].shape[1]
    num_layers = len(params)

    # Batch tiling: 256-row tiles for large batches (good DMA/MXU utilization),
    # otherwise a single sublane-aligned tile.  Pad batch to the tile size.
    tb = 256 if B >= 256 else _round_up(B, 8)
    bp = _round_up(B, tb)
    if bp != B:
        x = jnp.pad(x, ((0, bp - B), (0, 0)))
    grid = (bp // tb,)

    # Activations tile over the batch grid; weights/biases use a constant
    # index_map so they stay resident in VMEM across batch tiles.
    in_specs = [pl.BlockSpec((tb, din), lambda i: (i, 0))]
    flat_inputs = [x]
    for w, b in params:
        in_specs.append(pl.BlockSpec(w.shape, lambda i: (0, 0)))
        in_specs.append(pl.BlockSpec(b.shape, lambda i: (0, 0)))
        flat_inputs.append(w)
        flat_inputs.append(b)
    out_specs = pl.BlockSpec((tb, dout), lambda i: (i, 0))

    # Advisory cost estimate: 2*M*K*N flops per layer, params + activations bytes.
    flops = 0
    param_bytes = 0
    for w, b in params:
        flops += 2 * bp * w.shape[0] * w.shape[1]
        param_bytes += (w.size + b.size) * 4
    bytes_accessed = param_bytes + (bp * din + bp * dout) * 4
    cost = pl.CostEstimate(flops=flops, transcendentals=0,
                           bytes_accessed=bytes_accessed)

    out = pl.pallas_call(
        functools.partial(_mlp_fused_kernel, num_layers=num_layers),
        out_shape=jax.ShapeDtypeStruct((bp, dout), jnp.float32),
        grid=grid,
        in_specs=in_specs,
        out_specs=out_specs,
        compiler_params=pltpu.CompilerParams(
            dimension_semantics=("parallel",)),
        cost_estimate=cost,
    )(*flat_inputs)
    return out[:B]


if __name__ == "__main__":
    key = jax.random.PRNGKey(0)
    k_in, k_par = jax.random.split(key)

    # module-consistent small shapes: input (B=2, C=4, H=16, W=16) -> flatten 1024
    B, C, H, W = 2, 4, 16, 16
    input_dim = C * H * W
    hidden_sizes = (32, 32)
    output_dim = 8

    x = jax.random.normal(k_in, (B, C, H, W), dtype=jnp.float32)
    params = init_mlp_params(k_par, input_dim, output_dim, hidden_sizes)

    out = mlp_forward(params, x)
    jax.block_until_ready(out)

    # sanity check against a pure-JAX reference
    ref = x.reshape(B, -1)
    for w, b in params[:-1]:
        ref = jnp.maximum(ref @ w + b, 0.0)
    ref = ref @ params[-1][0] + params[-1][1]
    assert out.shape == (B, output_dim)
    assert jnp.allclose(out, ref, atol=1e-4, rtol=1e-4)

    print("KERNEL_OK")
</pallas_src>

<mosaic_0001>
module attributes {stable_mosaic.version = 11 : i64} {
  func.func @_mlp_fused_kernel(%arg0: i32, %arg1: memref<8x1024xf32, #tpu.memory_space<vmem>>, %arg2: memref<1024x32xf32, #tpu.memory_space<vmem>>, %arg3: memref<1x32xf32, #tpu.memory_space<vmem>>, %arg4: memref<32x32xf32, #tpu.memory_space<vmem>>, %arg5: memref<1x32xf32, #tpu.memory_space<vmem>>, %arg6: memref<32x8xf32, #tpu.memory_space<vmem>>, %arg7: memref<1x8xf32, #tpu.memory_space<vmem>>, %arg8: memref<8x8xf32, #tpu.memory_space<vmem>>) attributes {dimension_semantics = [#tpu.dimension_semantics<parallel>], iteration_bounds = array<i64: 1>, scalar_prefetch = 0 : i64, scratch_operands = 0 : i64, tpu.core_type = #tpu.core_type<tc>, window_params = [{transform_indices = @transform_0, window_bounds = array<i64: 8, 1024>}, {pipeline_mode = #tpu.pipeline_mode<synchronous>, transform_indices = @transform_1, window_bounds = array<i64: 1024, 32>}, {pipeline_mode = #tpu.pipeline_mode<synchronous>, transform_indices = @transform_2, window_bounds = array<i64: 1, 32>}, {pipeline_mode = #tpu.pipeline_mode<synchronous>, transform_indices = @transform_3, window_bounds = array<i64: 32, 32>}, {pipeline_mode = #tpu.pipeline_mode<synchronous>, transform_indices = @transform_4, window_bounds = array<i64: 1, 32>}, {pipeline_mode = #tpu.pipeline_mode<synchronous>, transform_indices = @transform_5, window_bounds = array<i64: 32, 8>}, {pipeline_mode = #tpu.pipeline_mode<synchronous>, transform_indices = @transform_6, window_bounds = array<i64: 1, 8>}, {transform_indices = @transform_7, window_bounds = array<i64: 8, 8>}]} {
    %c0 = arith.constant 0 : index
    %c0_0 = arith.constant 0 : index
    %0 = vector.load %arg1[%c0, %c0_0] : memref<8x1024xf32, #tpu.memory_space<vmem>>, vector<8x1024xf32>
    %c0_1 = arith.constant 0 : index
    %c0_2 = arith.constant 0 : index
    %1 = vector.load %arg2[%c0_1, %c0_2] : memref<1024x32xf32, #tpu.memory_space<vmem>>, vector<1024x32xf32>
    %c0_3 = arith.constant 0 : index
    %c0_4 = arith.constant 0 : index
    %2 = vector.load %arg3[%c0_3, %c0_4] : memref<1x32xf32, #tpu.memory_space<vmem>>, vector<1x32xf32>
    %cst = arith.constant dense<0.000000e+00> : vector<8x32xf32>
    %3 = tpu.matmul %0, %1, %cst {dimension_numbers = #tpu.dot_dimension_numbers<[1], [0], [0], [1], [0, 0, 1, 1], [], []>} : vector<8x1024xf32>, vector<1024x32xf32>, vector<8x32xf32> -> vector<8x32xf32>
    %4 = vector.broadcast %2 : vector<1x32xf32> to vector<8x32xf32>
    %5 = arith.addf %3, %4 : vector<8x32xf32>
    %cst_5 = arith.constant 0.000000e+00 : f32
    %6 = vector.broadcast %cst_5 : f32 to vector<8x32xf32>
    %7 = arith.maximumf %5, %6 : vector<8x32xf32>
    %c0_6 = arith.constant 0 : index
    %c0_7 = arith.constant 0 : index
    %8 = vector.load %arg4[%c0_6, %c0_7] : memref<32x32xf32, #tpu.memory_space<vmem>>, vector<32x32xf32>
    %c0_8 = arith.constant 0 : index
    %c0_9 = arith.constant 0 : index
    %9 = vector.load %arg5[%c0_8, %c0_9] : memref<1x32xf32, #tpu.memory_space<vmem>>, vector<1x32xf32>
    %cst_10 = arith.constant dense<0.000000e+00> : vector<8x32xf32>
    %10 = tpu.matmul %7, %8, %cst_10 {dimension_numbers = #tpu.dot_dimension_numbers<[1], [0], [0], [1], [0, 0, 1, 1], [], []>} : vector<8x32xf32>, vector<32x32xf32>, vector<8x32xf32> -> vector<8x32xf32>
    %11 = vector.broadcast %9 : vector<1x32xf32> to vector<8x32xf32>
    %12 = arith.addf %10, %11 : vector<8x32xf32>
    %cst_11 = arith.constant 0.000000e+00 : f32
    %13 = vector.broadcast %cst_11 : f32 to vector<8x32xf32>
    %14 = arith.maximumf %12, %13 : vector<8x32xf32>
    %c0_12 = arith.constant 0 : index
    %c0_13 = arith.constant 0 : index
    %15 = vector.load %arg6[%c0_12, %c0_13] : memref<32x8xf32, #tpu.memory_space<vmem>>, vector<32x8xf32>
    %c0_14 = arith.constant 0 : index
    %c0_15 = arith.constant 0 : index
    %16 = vector.load %arg7[%c0_14, %c0_15] : memref<1x8xf32, #tpu.memory_space<vmem>>, vector<1x8xf32>
    %cst_16 = arith.constant dense<0.000000e+00> : vector<8x8xf32>
    %17 = tpu.matmul %14, %15, %cst_16 {dimension_numbers = #tpu.dot_dimension_numbers<[1], [0], [0], [1], [0, 0, 1, 1], [], []>} : vector<8x32xf32>, vector<32x8xf32>, vector<8x8xf32> -> vector<8x8xf32>
    %18 = vector.broadcast %16 : vector<1x8xf32> to vector<8x8xf32>
    %19 = arith.addf %17, %18 : vector<8x8xf32>
    %c0_17 = arith.constant 0 : index
    %c0_18 = arith.constant 0 : index
    %20 = vector.load %arg8[%c0_17, %c0_18] : memref<8x8xf32, #tpu.memory_space<vmem>>, vector<8x8xf32>
    tpu.vector_store %arg8[%c0_17, %c0_18], %19 {strides = array<i32>} : memref<8x8xf32, #tpu.memory_space<vmem>>, vector<8x8xf32>,
    return
  }
  func.func @transform_0(%arg0: i32) -> (i32, i32) {
    %c0_i32 = arith.constant 0 : i32
    %c0_i32_0 = arith.constant 0 : i32
    return %arg0, %c0_i32 : i32, i32
  }
  func.func @transform_1(%arg0: i32) -> (i32, i32) {
    %c0_i32 = arith.constant 0 : i32
    %c0_i32_0 = arith.constant 0 : i32
    %c0_i32_1 = arith.constant 0 : i32
    return %c0_i32, %c0_i32_0 : i32, i32
  }
  func.func @transform_2(%arg0: i32) -> (i32, i32) {
    %c0_i32 = arith.constant 0 : i32
    %c0_i32_0 = arith.constant 0 : i32
    %c0_i32_1 = arith.constant 0 : i32
    return %c0_i32, %c0_i32_0 : i32, i32
  }
  func.func @transform_3(%arg0: i32) -> (i32, i32) {
    %c0_i32 = arith.constant 0 : i32
    %c0_i32_0 = arith.constant 0 : i32
    %c0_i32_1 = arith.constant 0 : i32
    return %c0_i32, %c0_i32_0 : i32, i32
  }
  func.func @transform_4(%arg0: i32) -> (i32, i32) {
    %c0_i32 = arith.constant 0 : i32
    %c0_i32_0 = arith.constant 0 : i32
    %c0_i32_1 = arith.constant 0 : i32
    return %c0_i32, %c0_i32_0 : i32, i32
  }
  func.func @transform_5(%arg0: i32) -> (i32, i32) {
    %c0_i32 = arith.constant 0 : i32
    %c0_i32_0 = arith.constant 0 : i32
    %c0_i32_1 = arith.constant 0 : i32
    return %c0_i32, %c0_i32_0 : i32, i32
  }
  func.func @transform_6(%arg0: i32) -> (i32, i32) {
    %c0_i32 = arith.constant 0 : i32
    %c0_i32_0 = arith.constant 0 : i32
    %c0_i32_1 = arith.constant 0 : i32
    return %c0_i32, %c0_i32_0 : i32, i32
  }
  func.func @transform_7(%arg0: i32) -> (i32, i32) {
    %c0_i32 = arith.constant 0 : i32
    %c0_i32_0 = arith.constant 0 : i32
    return %arg0, %c0_i32 : i32, i32
  }
}

</mosaic_0001>

<llo_original>
// kernel: tpu_custom_call.1
$region0: #{tpu_custom_call.1}
  #allocation0 [shape = 'u32[]', space=smem, size = 0x4, offset = 0x4, fixed_abs, tag = 'smem constant byte address 0x4 - core index']
  #allocation1 [shape = 'u32[144,128]{1,0:T(1,128)}', space=vmem, size = 0x12000, scoped, tag = 'internal scratch']
  %s0 = inlined_call_operand.vmem [shape: f32[8,1024], index: 0, kind: input, shape index: {}]
  %s1 = inlined_call_operand.vmem [shape: f32[1024,32], index: 1, kind: input, shape index: {}]
  %s2 = inlined_call_operand.vmem [shape: f32[1,32], index: 2, kind: input, shape index: {}]
  %s3 = inlined_call_operand.vmem [shape: f32[32,32], index: 3, kind: input, shape index: {}]
  %s4 = inlined_call_operand.vmem [shape: f32[1,32], index: 4, kind: input, shape index: {}]
  %s5 = inlined_call_operand.vmem [shape: f32[32,8], index: 5, kind: input, shape index: {}]
  %s6 = inlined_call_operand.vmem [shape: f32[1,8], index: 6, kind: input, shape index: {}]
  %s7 = inlined_call_operand.hbm [shape: f32[8,8], index: 7, kind: output, shape index: {}]
  %s8 = sld [smem:[#allocation0]]
  $region38: #{tpu_custom_call.1} parent=0
    _
  %s10 = ssub.s32 1, %s8
  %s11 = scalar_select 0, %s10, %s8
  $region1: #{tpu_custom_call.1} parent=0
    #allocation2 [shape = 'u8[4096]{0}', space=vmem, size = 0x1000, scoped, tag = 'output window, operand 0, single buffered']
    #allocation3 [shape = 's32[1]{0}', space=sflag, size = 0x4, scoped, tag = 'scoped memory for tpu_custom_call.1']
    %12 = vsyncpa [#allocation3], 0
    // Predicated region
    $region2: #{tpu_custom_call.1} parent=1 // pred_check
      _
    $region3: #{tpu_custom_call.1} parent=1 // pred_check_branch
      %14 = sbr.rel (0) target = $region5
    $region4: #{tpu_custom_call.1} parent=1 // pred_region
      _
    $region5: #{tpu_custom_call.1} parent=1 // pred_fallthru
      _
    // Predicated region
    $region6: #{tpu_custom_call.1} parent=1 // pred_check
      _
    $region7: #{tpu_custom_call.1} parent=1 // pred_check_branch
      %16 = sbr.rel (0) target = $region9
    $region8: #{tpu_custom_call.1} parent=1 // pred_region
      _
    $region9: #{tpu_custom_call.1} parent=1 // pred_fallthru
      _
    // Predicated region
    $region10: #{tpu_custom_call.1} parent=1 // pred_check
      _
    $region11: #{tpu_custom_call.1} parent=1 // pred_check_branch
      %18 = sbr.rel (0) target = $region13
    $region12: #{tpu_custom_call.1} parent=1 // pred_region
      _
    $region13: #{tpu_custom_call.1} parent=1 // pred_fallthru
      _
    // Predicated region
    $region14: #{tpu_custom_call.1} parent=1 // pred_check
      _
    $region15: #{tpu_custom_call.1} parent=1 // pred_check_branch
      %20 = sbr.rel (0) target = $region17
    $region16: #{tpu_custom_call.1} parent=1 // pred_region
      _
    $region17: #{tpu_custom_call.1} parent=1 // pred_fallthru
      _
    // Predicated region
    $region18: #{tpu_custom_call.1} parent=1 // pred_check
      _
    $region19: #{tpu_custom_call.1} parent=1 // pred_check_branch
      %22 = sbr.rel (0) target = $region21
    $region20: #{tpu_custom_call.1} parent=1 // pred_region
      _
    $region21: #{tpu_custom_call.1} parent=1 // pred_fallthru
      _
    // Predicated region
    $region22: #{tpu_custom_call.1} parent=1 // pred_check
      _
    $region23: #{tpu_custom_call.1} parent=1 // pred_check_branch
      %24 = sbr.rel (0) target = $region25
    $region24: #{tpu_custom_call.1} parent=1 // pred_region
      _
    $region25: #{tpu_custom_call.1} parent=1 // pred_fallthru
      _
    // Predicated region
    $region26: #{tpu_custom_call.1} parent=1 // pred_check
      _
    $region27: #{tpu_custom_call.1} parent=1 // pred_check_branch
      %26 = sbr.rel (0) target = $region29
    $region28: #{tpu_custom_call.1} parent=1 // pred_region
      _
    $region29: #{tpu_custom_call.1} parent=1 // pred_fallthru
      _
    %v27 = vld [vmem:[%s0] sm:$0xff]
    %v28 = vld [vmem:[%s0 + $0x8] sm:$0xff]
    %v29 = vld [vmem:[%s0 + $0x10] sm:$0xff]
    %v30 = vld [vmem:[%s0 + $0x18] sm:$0xff]
    %v31 = vld [vmem:[%s0 + $0x20] sm:$0xff]
    %v32 = vld [vmem:[%s0 + $0x28] sm:$0xff]
    %v33 = vld [vmem:[%s0 + $0x30] sm:$0xff]
    %v34 = vld [vmem:[%s0 + $0x38] sm:$0xff]
    %v35 = vld [vmem:[%s1] sm:$0xff]
    %v36 = vld [vmem:[%s1 + $0x8] sm:$0xff]
    %v37 = vld [vmem:[%s1 + $0x10] sm:$0xff]
    %v38 = vld [vmem:[%s1 + $0x18] sm:$0xff]
    %v39 = vld [vmem:[%s1 + $0x20] sm:$0xff]
    %v40 = vld [vmem:[%s1 + $0x28] sm:$0xff]
    %v41 = vld [vmem:[%s1 + $0x30] sm:$0xff]
    %v42 = vld [vmem:[%s1 + $0x38] sm:$0xff]
    %v43 = vld [vmem:[%s1 + $0x40] sm:$0xff]
    %v44 = vld [vmem:[%s1 + $0x48] sm:$0xff]
    %v45 = vld [vmem:[%s1 + $0x50] sm:$0xff]
    %v46 = vld [vmem:[%s1 + $0x58] sm:$0xff]
    %v47 = vld [vmem:[%s1 + $0x60] sm:$0xff]
    %v48 = vld [vmem:[%s1 + $0x68] sm:$0xff]
    %v49 = vld [vmem:[%s1 + $0x70] sm:$0xff]
    %v50 = vld [vmem:[%s1 + $0x78] sm:$0xff]
    %v51 = vld [vmem:[%s1 + $0x80] sm:$0xff]
    %v52 = vld [vmem:[%s1 + $0x88] sm:$0xff]
    %v53 = vld [vmem:[%s1 + $0x90] sm:$0xff]
    %v54 = vld [vmem:[%s1 + $0x98] sm:$0xff]
    %v55 = vld [vmem:[%s1 + $0xa0] sm:$0xff]
    %v56 = vld [vmem:[%s1 + $0xa8] sm:$0xff]
    %v57 = vld [vmem:[%s1 + $0xb0] sm:$0xff]
    %v58 = vld [vmem:[%s1 + $0xb8] sm:$0xff]
    %v59 = vld [vmem:[%s1 + $0xc0] sm:$0xff]
    %v60 = vld [vmem:[%s1 + $0xc8] sm:$0xff]
    %v61 = vld [vmem:[%s1 + $0xd0] sm:$0xff]
    %v62 = vld [vmem:[%s1 + $0xd8] sm:$0xff]
    %v63 = vld [vmem:[%s1 + $0xe0] sm:$0xff]
    %v64 = vld [vmem:[%s1 + $0xe8] sm:$0xff]
    %v65 = vld [vmem:[%s1 + $0xf0] sm:$0xff]
    %v66 = vld [vmem:[%s1 + $0xf8] sm:$0xff]
    %v67 = vld [vmem:[%s1 + $0x100] sm:$0xff]
    %v68 = vld [vmem:[%s1 + $0x108] sm:$0xff]
    %v69 = vld [vmem:[%s1 + $0x110] sm:$0xff]
    %v70 = vld [vmem:[%s1 + $0x118] sm:$0xff]
    %v71 = vld [vmem:[%s1 + $0x120] sm:$0xff]
    %v72 = vld [vmem:[%s1 + $0x128] sm:$0xff]
    %v73 = vld [vmem:[%s1 + $0x130] sm:$0xff]
    %v74 = vld [vmem:[%s1 + $0x138] sm:$0xff]
    %v75 = vld [vmem:[%s1 + $0x140] sm:$0xff]
    %v76 = vld [vmem:[%s1 + $0x148] sm:$0xff]
    %v77 = vld [vmem:[%s1 + $0x150] sm:$0xff]
    %v78 = vld [vmem:[%s1 + $0x158] sm:$0xff]
    %v79 = vld [vmem:[%s1 + $0x160] sm:$0xff]
    %v80 = vld [vmem:[%s1 + $0x168] sm:$0xff]
    %v81 = vld [vmem:[%s1 + $0x170] sm:$0xff]
    %v82 = vld [vmem:[%s1 + $0x178] sm:$0xff]
    %v83 = vld [vmem:[%s1 + $0x180] sm:$0xff]
    %v84 = vld [vmem:[%s1 + $0x188] sm:$0xff]
    %v85 = vld [vmem:[%s1 + $0x190] sm:$0xff]
    %v86 = vld [vmem:[%s1 + $0x198] sm:$0xff]
    %v87 = vld [vmem:[%s1 + $0x1a0] sm:$0xff]
    %v88 = vld [vmem:[%s1 + $0x1a8] sm:$0xff]
    %v89 = vld [vmem:[%s1 + $0x1b0] sm:$0xff]
    %v90 = vld [vmem:[%s1 + $0x1b8] sm:$0xff]
    %v91 = vld [vmem:[%s1 + $0x1c0] sm:$0xff]
    %v92 = vld [vmem:[%s1 + $0x1c8] sm:$0xff]
    %v93 = vld [vmem:[%s1 + $0x1d0] sm:$0xff]
    %v94 = vld [vmem:[%s1 + $0x1d8] sm:$0xff]
    %v95 = vld [vmem:[%s1 + $0x1e0] sm:$0xff]
    %v96 = vld [vmem:[%s1 + $0x1e8] sm:$0xff]
    %v97 = vld [vmem:[%s1 + $0x1f0] sm:$0xff]
    %v98 = vld [vmem:[%s1 + $0x1f8] sm:$0xff]
    %v99 = vld [vmem:[%s1 + $0x200] sm:$0xff]
    %v100 = vld [vmem:[%s1 + $0x208] sm:$0xff]
    %v101 = vld [vmem:[%s1 + $0x210] sm:$0xff]
    %v102 = vld [vmem:[%s1 + $0x218] sm:$0xff]
    %v103 = vld [vmem:[%s1 + $0x220] sm:$0xff]
    %v104 = vld [vmem:[%s1 + $0x228] sm:$0xff]
    %v105 = vld [vmem:[%s1 + $0x230] sm:$0xff]
    %v106 = vld [vmem:[%s1 + $0x238] sm:$0xff]
    %v107 = vld [vmem:[%s1 + $0x240] sm:$0xff]
    %v108 = vld [vmem:[%s1 + $0x248] sm:$0xff]
    %v109 = vld [vmem:[%s1 + $0x250] sm:$0xff]
    %v110 = vld [vmem:[%s1 + $0x258] sm:$0xff]
    %v111 = vld [vmem:[%s1 + $0x260] sm:$0xff]
    %v112 = vld [vmem:[%s1 + $0x268] sm:$0xff]
    %v113 = vld [vmem:[%s1 + $0x270] sm:$0xff]
    %v114 = vld [vmem:[%s1 + $0x278] sm:$0xff]
    %v115 = vld [vmem:[%s1 + $0x280] sm:$0xff]
    %v116 = vld [vmem:[%s1 + $0x288] sm:$0xff]
    %v117 = vld [vmem:[%s1 + $0x290] sm:$0xff]
    %v118 = vld [vmem:[%s1 + $0x298] sm:$0xff]
    %v119 = vld [vmem:[%s1 + $0x2a0] sm:$0xff]
    %v120 = vld [vmem:[%s1 + $0x2a8] sm:$0xff]
    %v121 = vld [vmem:[%s1 + $0x2b0] sm:$0xff]
    %v122 = vld [vmem:[%s1 + $0x2b8] sm:$0xff]
    %v123 = vld [vmem:[%s1 + $0x2c0] sm:$0xff]
    %v124 = vld [vmem:[%s1 + $0x2c8] sm:$0xff]
    %v125 = vld [vmem:[%s1 + $0x2d0] sm:$0xff]
    %v126 = vld [vmem:[%s1 + $0x2d8] sm:$0xff]
    %v127 = vld [vmem:[%s1 + $0x2e0] sm:$0xff]
    %v128 = vld [vmem:[%s1 + $0x2e8] sm:$0xff]
    %v129 = vld [vmem:[%s1 + $0x2f0] sm:$0xff]
    %v130 = vld [vmem:[%s1 + $0x2f8] sm:$0xff]
    %v131 = vld [vmem:[%s1 + $0x300] sm:$0xff]
    %v132 = vld [vmem:[%s1 + $0x308] sm:$0xff]
    %v133 = vld [vmem:[%s1 + $0x310] sm:$0xff]
    %v134 = vld [vmem:[%s1 + $0x318] sm:$0xff]
    %v135 = vld [vmem:[%s1 + $0x320] sm:$0xff]
    %v136 = vld [vmem:[%s1 + $0x328] sm:$0xff]
    %v137 = vld [vmem:[%s1 + $0x330] sm:$0xff]
    %v138 = vld [vmem:[%s1 + $0x338] sm:$0xff]
    %v139 = vld [vmem:[%s1 + $0x340] sm:$0xff]
    %v140 = vld [vmem:[%s1 + $0x348] sm:$0xff]
    %v141 = vld [vmem:[%s1 + $0x350] sm:$0xff]
    %v142 = vld [vmem:[%s1 + $0x358] sm:$0xff]
    %v143 = vld [vmem:[%s1 + $0x360] sm:$0xff]
    %v144 = vld [vmem:[%s1 + $0x368] sm:$0xff]
    %v145 = vld [vmem:[%s1 + $0x370] sm:$0xff]
    %v146 = vld [vmem:[%s1 + $0x378] sm:$0xff]
    %v147 = vld [vmem:[%s1 + $0x380] sm:$0xff]
    %v148 = vld [vmem:[%s1 + $0x388] sm:$0xff]
    %v149 = vld [vmem:[%s1 + $0x390] sm:$0xff]
    %v150 = vld [vmem:[%s1 + $0x398] sm:$0xff]
    %v151 = vld [vmem:[%s1 + $0x3a0] sm:$0xff]
    %v152 = vld [vmem:[%s1 + $0x3a8] sm:$0xff]
    %v153 = vld [vmem:[%s1 + $0x3b0] sm:$0xff]
    %v154 = vld [vmem:[%s1 + $0x3b8] sm:$0xff]
    %v155 = vld [vmem:[%s1 + $0x3c0] sm:$0xff]
    %v156 = vld [vmem:[%s1 + $0x3c8] sm:$0xff]
    %v157 = vld [vmem:[%s1 + $0x3d0] sm:$0xff]
    %v158 = vld [vmem:[%s1 + $0x3d8] sm:$0xff]
    %v159 = vld [vmem:[%s1 + $0x3e0] sm:$0xff]
    %v160 = vld [vmem:[%s1 + $0x3e8] sm:$0xff]
    %v161 = vld [vmem:[%s1 + $0x3f0] sm:$0xff]
    %v162 = vld [vmem:[%s1 + $0x3f8] sm:$0xff]
    %v163 = vld [vmem:[%s2] sm:$0x1]
    %v165 = vlaneseq
    %v166 = vshrl.u32 %v165, 7
    %v167 = vsub.s32 0, %v166
    %v168 = vrot.slane %v163, %v167
    %170 = vmatprep.subr.mxu0 0.0
    %171 = vmatpush1.msra.mxu0 %v50
    %172 = vmatprep.subr.mxu0 0.0
    %173 = vmatpush1.msra.mxu0 %v49
    %174 = vmatprep.subr.mxu0 0.0
    %175 = vmatpush1.msra.mxu0 %v48
    %176 = vmatprep.subr.mxu0 0.0
    %177 = vmatpush1.msra.mxu0 %v47
    %178 = vmatprep.subr.mxu0 0.0
    %179 = vmatpush1.msra.mxu0 %v46
    %180 = vmatprep.subr.mxu0 0.0
    %181 = vmatpush1.msra.mxu0 %v45
    %182 = vmatprep.subr.mxu0 0.0
    %183 = vmatpush1.msra.mxu0 %v44
    %184 = vmatprep.subr.mxu0 0.0
    %185 = vmatpush1.msra.mxu0 %v43
    %186 = vmatprep.subr.mxu0 0.0
    %187 = vmatpush1.msra.mxu0 %v42
    %188 = vmatprep.subr.mxu0 0.0
    %189 = vmatpush1.msra.mxu0 %v41
    %190 = vmatprep.subr.mxu0 0.0
    %191 = vmatpush1.msra.mxu0 %v40
    %192 = vmatprep.subr.mxu0 0.0
    %193 = vmatpush1.msra.mxu0 %v39
    %194 = vmatprep.subr.mxu0 0.0
    %195 = vmatpush1.msra.mxu0 %v38
    %196 = vmatprep.subr.mxu0 0.0
    %197 = vmatpush1.msra.mxu0 %v37
    %198 = vmatprep.subr.mxu0 0.0
    %199 = vmatpush1.msra.mxu0 %v36
    %200 = vmatprep.subr.mxu0 0.0
    %201 = vmatpush1.msra.mxu0 %v35
    %202 = vmatprep.subr.mxu0 0.0
    %203 = vmatpush2.msra.mxu0 %v66
    %204 = vmatprep.subr.mxu0 0.0
    %205 = vmatpush2.msra.mxu0 %v65
    %206 = vmatprep.subr.mxu0 0.0
    %207 = vmatpush2.msra.mxu0 %v64
    %208 = vmatprep.subr.mxu0 0.0
    %209 = vmatpush2.msra.mxu0 %v63
    %210 = vmatprep.subr.mxu0 0.0
    %211 = vmatpush2.msra.mxu0 %v62
    %212 = vmatprep.subr.mxu0 0.0
    %213 = vmatpush2.msra.mxu0 %v61
    %214 = vmatprep.subr.mxu0 0.0
    %215 = vmatpush2.msra.mxu0 %v60
    %216 = vmatprep.subr.mxu0 0.0
    %217 = vmatpush2.msra.mxu0 %v59
    %218 = vmatprep.subr.mxu0 0.0
    %219 = vmatpush2.msra.mxu0 %v58
    %220 = vmatprep.subr.mxu0 0.0
    %221 = vmatpush2.msra.mxu0 %v57
    %222 = vmatprep.subr.mxu0 0.0
    %223 = vmatpush2.msra.mxu0 %v56
    %224 = vmatprep.subr.mxu0 0.0
    %225 = vmatpush2.msra.mxu0 %v55
    %226 = vmatprep.subr.mxu0 0.0
    %227 = vmatpush2.msra.mxu0 %v54
    %228 = vmatprep.subr.mxu0 0.0
    %229 = vmatpush2.msra.mxu0 %v53
    %230 = vmatprep.subr.mxu0 0.0
    %231 = vmatpush2.msra.mxu0 %v52
    %232 = vmatprep.subr.mxu0 0.0
    %233 = vmatpush2.msra.mxu0 %v51
    %234 = vmatprep.mubr.f32.mxu0 %v28
    %235 = vmatmul.mubr.f32.gmra.mxu0 %v27
    %v236 = vpop.f32.mrf.mxu0
    %v237 = vadd.f32 %v168, %v236
    %v238 = vpop.f32.mrf.mxu0
    %239 = vdwg.mxu0
    %240 = vmatprep.subr.mxu0 0.0
    %241 = vmatpush1.msra.mxu0 %v82
    %242 = vmatprep.subr.mxu0 0.0
    %243 = vmatpush1.msra.mxu0 %v81
    %244 = vmatprep.subr.mxu0 0.0
    %245 = vmatpush1.msra.mxu0 %v80
    %246 = vmatprep.subr.mxu0 0.0
    %247 = vmatpush1.msra.mxu0 %v79
    %248 = vmatprep.subr.mxu0 0.0
    %249 = vmatpush1.msra.mxu0 %v78
    %250 = vmatprep.subr.mxu0 0.0
    %251 = vmatpush1.msra.mxu0 %v77
    %252 = vmatprep.subr.mxu0 0.0
    %253 = vmatpush1.msra.mxu0 %v76
    %254 = vmatprep.subr.mxu0 0.0
    %255 = vmatpush1.msra.mxu0 %v75
    %256 = vmatprep.subr.mxu0 0.0
    %257 = vmatpush1.msra.mxu0 %v74
    %258 = vmatprep.subr.mxu0 0.0
    %259 = vmatpush1.msra.mxu0 %v73
    %260 = vmatprep.subr.mxu0 0.0
    %261 = vmatpush1.msra.mxu0 %v72
    %262 = vmatprep.subr.mxu0 0.0
    %263 = vmatpush1.msra.mxu0 %v71
    %264 = vmatprep.subr.mxu0 0.0
    %265 = vmatpush1.msra.mxu0 %v70
    %266 = vmatprep.subr.mxu0 0.0
    %267 = vmatpush1.msra.mxu0 %v69
    %268 = vmatprep.subr.mxu0 0.0
    %269 = vmatpush1.msra.mxu0 %v68
    %270 = vmatprep.subr.mxu0 0.0
    %271 = vmatpush1.msra.mxu0 %v67
    %272 = vmatprep.subr.mxu0 0.0
    %273 = vmatpush2.msra.mxu0 %v98
    %274 = vmatprep.subr.mxu0 0.0
    %275 = vmatpush2.msra.mxu0 %v97
    %276 = vmatprep.subr.mxu0 0.0
    %277 = vmatpush2.msra.mxu0 %v96
    %278 = vmatprep.subr.mxu0 0.0
    %279 = vmatpush2.msra.mxu0 %v95
    %280 = vmatprep.subr.mxu0 0.0
    %281 = vmatpush2.msra.mxu0 %v94
    %282 = vmatprep.subr.mxu0 0.0
    %283 = vmatpush2.msra.mxu0 %v93
    %284 = vmatprep.subr.mxu0 0.0
    %285 = vmatpush2.msra.mxu0 %v92
    %286 = vmatprep.subr.mxu0 0.0
    %287 = vmatpush2.msra.mxu0 %v91
    %288 = vmatprep.subr.mxu0 0.0
    %289 = vmatpush2.msra.mxu0 %v90
    %290 = vmatprep.subr.mxu0 0.0
    %291 = vmatpush2.msra.mxu0 %v89
    %292 = vmatprep.subr.mxu0 0.0
    %293 = vmatpush2.msra.mxu0 %v88
    %294 = vmatprep.subr.mxu0 0.0
    %295 = vmatpush2.msra.mxu0 %v87
    %296 = vmatprep.subr.mxu0 0.0
    %297 = vmatpush2.msra.mxu0 %v86
    %298 = vmatprep.subr.mxu0 0.0
    %299 = vmatpush2.msra.mxu0 %v85
    %300 = vmatprep.subr.mxu0 0.0
    %301 = vmatpush2.msra.mxu0 %v84
    %302 = vmatprep.subr.mxu0 0.0
    %303 = vmatpush2.msra.mxu0 %v83
    %304 = vmatprep.mubr.f32.mxu0 %v30
    %305 = vmatmul.mubr.f32.gmra.mxu0 %v29
    %v306 = vpop.f32.mrf.mxu0
    %v307 = vadd.f32 %v237, %v306
    %v308 = vpop.f32.mrf.mxu0
    %309 = vdwg.mxu0
    %310 = vmatprep.subr.mxu0 0.0
    %311 = vmatpush1.msra.mxu0 %v114
    %312 = vmatprep.subr.mxu0 0.0
    %313 = vmatpush1.msra.mxu0 %v113
    %314 = vmatprep.subr.mxu0 0.0
    %315 = vmatpush1.msra.mxu0 %v112
    %316 = vmatprep.subr.mxu0 0.0
    %317 = vmatpush1.msra.mxu0 %v111
    %318 = vmatprep.subr.mxu0 0.0
    %319 = vmatpush1.msra.mxu0 %v110
    %320 = vmatprep.subr.mxu0 0.0
    %321 = vmatpush1.msra.mxu0 %v109
    %322 = vmatprep.subr.mxu0 0.0
    %323 = vmatpush1.msra.mxu0 %v108
    %324 = vmatprep.subr.mxu0 0.0
    %325 = vmatpush1.msra.mxu0 %v107
    %326 = vmatprep.subr.mxu0 0.0
    %327 = vmatpush1.msra.mxu0 %v106
    %328 = vmatprep.subr.mxu0 0.0
    %329 = vmatpush1.msra.mxu0 %v105
    %330 = vmatprep.subr.mxu0 0.0
    %331 = vmatpush1.msra.mxu0 %v104
    %332 = vmatprep.subr.mxu0 0.0
    %333 = vmatpush1.msra.mxu0 %v103
    %334 = vmatprep.subr.mxu0 0.0
    %335 = vmatpush1.msra.mxu0 %v102
    %336 = vmatprep.subr.mxu0 0.0
    %337 = vmatpush1.msra.mxu0 %v101
    %338 = vmatprep.subr.mxu0 0.0
    %339 = vmatpush1.msra.mxu0 %v100
    %340 = vmatprep.subr.mxu0 0.0
    %341 = vmatpush1.msra.mxu0 %v99
    %342 = vmatprep.subr.mxu0 0.0
    %343 = vmatpush2.msra.mxu0 %v130
    %344 = vmatprep.subr.mxu0 0.0
    %345 = vmatpush2.msra.mxu0 %v129
    %346 = vmatprep.subr.mxu0 0.0
    %347 = vmatpush2.msra.mxu0 %v128
    %348 = vmatprep.subr.mxu0 0.0
    %349 = vmatpush2.msra.mxu0 %v127
    %350 = vmatprep.subr.mxu0 0.0
    %351 = vmatpush2.msra.mxu0 %v126
    %352 = vmatprep.subr.mxu0 0.0
    %353 = vmatpush2.msra.mxu0 %v125
    %354 = vmatprep.subr.mxu0 0.0
    %355 = vmatpush2.msra.mxu0 %v124
    %356 = vmatprep.subr.mxu0 0.0
    %357 = vmatpush2.msra.mxu0 %v123
    %358 = vmatprep.subr.mxu0 0.0
    %359 = vmatpush2.msra.mxu0 %v122
    %360 = vmatprep.subr.mxu0 0.0
    %361 = vmatpush2.msra.mxu0 %v121
    %362 = vmatprep.subr.mxu0 0.0
    %363 = vmatpush2.msra.mxu0 %v120
    %364 = vmatprep.subr.mxu0 0.0
    %365 = vmatpush2.msra.mxu0 %v119
    %366 = vmatprep.subr.mxu0 0.0
    %367 = vmatpush2.msra.mxu0 %v118
    %368 = vmatprep.subr.mxu0 0.0
    %369 = vmatpush2.msra.mxu0 %v117
    %370 = vmatprep.subr.mxu0 0.0
    %371 = vmatpush2.msra.mxu0 %v116
    %372 = vmatprep.subr.mxu0 0.0
    %373 = vmatpush2.msra.mxu0 %v115
    %374 = vmatprep.mubr.f32.mxu0 %v32
    %375 = vmatmul.mubr.f32.gmra.mxu0 %v31
    %v376 = vpop.f32.mrf.mxu0
    %v377 = vadd.f32 %v307, %v376
    %v378 = vpop.f32.mrf.mxu0
    %379 = vdwg.mxu0
    %380 = vmatprep.subr.mxu0 0.0
    %381 = vmatpush1.msra.mxu0 %v146
    %382 = vmatprep.subr.mxu0 0.0
    %383 = vmatpush1.msra.mxu0 %v145
    %384 = vmatprep.subr.mxu0 0.0
    %385 = vmatpush1.msra.mxu0 %v144
    %386 = vmatprep.subr.mxu0 0.0
    %387 = vmatpush1.msra.mxu0 %v143
    %388 = vmatprep.subr.mxu0 0.0
    %389 = vmatpush1.msra.mxu0 %v142
    %390 = vmatprep.subr.mxu0 0.0
    %391 = vmatpush1.msra.mxu0 %v141
    %392 = vmatprep.subr.mxu0 0.0
    %393 = vmatpush1.msra.mxu0 %v140
    %394 = vmatprep.subr.mxu0 0.0
    %395 = vmatpush1.msra.mxu0 %v139
    %396 = vmatprep.subr.mxu0 0.0
    %397 = vmatpush1.msra.mxu0 %v138
    %398 = vmatprep.subr.mxu0 0.0
    %399 = vmatpush1.msra.mxu0 %v137
    %400 = vmatprep.subr.mxu0 0.0
    %401 = vmatpush1.msra.mxu0 %v136
    %402 = vmatprep.subr.mxu0 0.0
    %403 = vmatpush1.msra.mxu0 %v135
    %404 = vmatprep.subr.mxu0 0.0
    %405 = vmatpush1.msra.mxu0 %v134
    %406 = vmatprep.subr.mxu0 0.0
    %407 = vmatpush1.msra.mxu0 %v133
    %408 = vmatprep.subr.mxu0 0.0
    %409 = vmatpush1.msra.mxu0 %v132
    %410 = vmatprep.subr.mxu0 0.0
    %411 = vmatpush1.msra.mxu0 %v131
    %412 = vmatprep.subr.mxu0 0.0
    %413 = vmatpush2.msra.mxu0 %v162
    %414 = vmatprep.subr.mxu0 0.0
    %415 = vmatpush2.msra.mxu0 %v161
    %416 = vmatprep.subr.mxu0 0.0
    %417 = vmatpush2.msra.mxu0 %v160
    %418 = vmatprep.subr.mxu0 0.0
    %419 = vmatpush2.msra.mxu0 %v159
    %420 = vmatprep.subr.mxu0 0.0
    %421 = vmatpush2.msra.mxu0 %v158
    %422 = vmatprep.subr.mxu0 0.0
    %423 = vmatpush2.msra.mxu0 %v157
    %424 = vmatprep.subr.mxu0 0.0
    %425 = vmatpush2.msra.mxu0 %v156
    %426 = vmatprep.subr.mxu0 0.0
    %427 = vmatpush2.msra.mxu0 %v155
    %428 = vmatprep.subr.mxu0 0.0
    %429 = vmatpush2.msra.mxu0 %v154
    %430 = vmatprep.subr.mxu0 0.0
    %431 = vmatpush2.msra.mxu0 %v153
    %432 = vmatprep.subr.mxu0 0.0
    %433 = vmatpush2.msra.mxu0 %v152
    %434 = vmatprep.subr.mxu0 0.0
    %435 = vmatpush2.msra.mxu0 %v151
    %436 = vmatprep.subr.mxu0 0.0
    %437 = vmatpush2.msra.mxu0 %v150
    %438 = vmatprep.subr.mxu0 0.0
    %439 = vmatpush2.msra.mxu0 %v149
    %440 = vmatprep.subr.mxu0 0.0
    %441 = vmatpush2.msra.mxu0 %v148
    %442 = vmatprep.subr.mxu0 0.0
    %443 = vmatpush2.msra.mxu0 %v147
    %444 = vmatprep.mubr.f32.mxu0 %v34
    %445 = vmatmul.mubr.f32.gmra.mxu0 %v33
    %v446 = vpop.f32.mrf.mxu0
    %v447 = vadd.f32 %v377, %v446
    %v448 = vpop.f32.mrf.mxu0
    %449 = vdwg.mxu0
    %v450 = vmax.f32 %v447, 0.0
    %v451 = vld [vmem:[%s3] sm:$0xff]
    %v452 = vld [vmem:[%s3 + $0x8] sm:$0xff]
    %v453 = vld [vmem:[%s3 + $0x10] sm:$0xff]
    %v454 = vld [vmem:[%s3 + $0x18] sm:$0xff]
    %v455 = vld [vmem:[%s4] sm:$0x1]
    %v457 = vlaneseq
    %v458 = vshrl.u32 %v457, 7
    %v459 = vsub.s32 0, %v458
    %v460 = vrot.slane %v455, %v459
    %vm462 = vcmask 261120
    %v464 = vsel %vm462, %v450, 0
    %466 = vmatprep.subr.mxu0 0.0
    %467 = vmatpush1.msra.mxu0 0.0
    %468 = vmatprep.subr.mxu0 0.0
    %469 = vmatpush1.msra.mxu0 0.0
    %470 = vmatprep.subr.mxu0 0.0
    %471 = vmatpush1.msra.mxu0 0.0
    %472 = vmatprep.subr.mxu0 0.0
    %473 = vmatpush1.msra.mxu0 0.0
    %474 = vmatprep.subr.mxu0 0.0
    %475 = vmatpush1.msra.mxu0 0.0
    %476 = vmatprep.subr.mxu0 0.0
    %477 = vmatpush1.msra.mxu0 0.0
    %478 = vmatprep.subr.mxu0 0.0
    %479 = vmatpush1.msra.mxu0 0.0
    %480 = vmatprep.subr.mxu0 0.0
    %481 = vmatpush1.msra.mxu0 0.0
    %482 = vmatprep.subr.mxu0 0.0
    %483 = vmatpush1.msra.mxu0 0.0
    %484 = vmatprep.subr.mxu0 0.0
    %485 = vmatpush1.msra.mxu0 0.0
    %486 = vmatprep.subr.mxu0 0.0
    %487 = vmatpush1.msra.mxu0 0.0
    %488 = vmatprep.subr.mxu0 0.0
    %489 = vmatpush1.msra.mxu0 0.0
    %490 = vmatprep.subr.mxu0 0.0
    %491 = vmatpush1.msra.mxu0 %v454
    %492 = vmatprep.subr.mxu0 0.0
    %493 = vmatpush1.msra.mxu0 %v453
    %494 = vmatprep.subr.mxu0 0.0
    %495 = vmatpush1.msra.mxu0 %v452
    %496 = vmatprep.subr.mxu0 0.0
    %497 = vmatpush1.msra.mxu0 %v451
    %498 = vmatprep.subr.mxu0 0.0
    %499 = vmatpush2.msra.mxu0 0.0
    %500 = vmatprep.subr.mxu0 0.0
    %501 = vmatpush2.msra.mxu0 0.0
    %502 = vmatprep.subr.mxu0 0.0
    %503 = vmatpush2.msra.mxu0 0.0
    %504 = vmatprep.subr.mxu0 0.0
    %505 = vmatpush2.msra.mxu0 0.0
    %506 = vmatprep.subr.mxu0 0.0
    %507 = vmatpush2.msra.mxu0 0.0
    %508 = vmatprep.subr.mxu0 0.0
    %509 = vmatpush2.msra.mxu0 0.0
    %510 = vmatprep.subr.mxu0 0.0
    %511 = vmatpush2.msra.mxu0 0.0
    %512 = vmatprep.subr.mxu0 0.0
    %513 = vmatpush2.msra.mxu0 0.0
    %514 = vmatprep.subr.mxu0 0.0
    %515 = vmatpush2.msra.mxu0 0.0
    %516 = vmatprep.subr.mxu0 0.0
    %517 = vmatpush2.msra.mxu0 0.0
    %518 = vmatprep.subr.mxu0 0.0
    %519 = vmatpush2.msra.mxu0 0.0
    %520 = vmatprep.subr.mxu0 0.0
    %521 = vmatpush2.msra.mxu0 0.0
    %522 = vmatprep.subr.mxu0 0.0
    %523 = vmatpush2.msra.mxu0 0.0
    %524 = vmatprep.subr.mxu0 0.0
    %525 = vmatpush2.msra.mxu0 0.0
    %526 = vmatprep.subr.mxu0 0.0
    %527 = vmatpush2.msra.mxu0 0.0
    %528 = vmatprep.subr.mxu0 0.0
    %529 = vmatpush2.msra.mxu0 0.0
    %530 = vmatprep.mubr.f32.mxu0 0.0
    %531 = vmatmul.mubr.f32.gmra.mxu0 %v464
    %v532 = vpop.f32.mrf.mxu0
    %v533 = vadd.f32 %v460, %v532
    %v534 = vpop.f32.mrf.mxu0
    %535 = vdwg.mxu0
    %v536 = vmax.f32 %v533, 0.0
    %v537 = vld [vmem:[%s5] sm:$0xff]
    %v538 = vld [vmem:[%s5 + $0x8] sm:$0xff]
    %v539 = vld [vmem:[%s5 + $0x10] sm:$0xff]
    %v540 = vld [vmem:[%s5 + $0x18] sm:$0xff]
    %v541 = vld [vmem:[%s6] sm:$0x1]
    %v543 = vlaneseq
    %v544 = vshrl.u32 %v543, 7
    %v545 = vsub.s32 0, %v544
    %v546 = vrot.slane %v541, %v545
    %v549 = vsel %vm462, %v536, 0
    %551 = vmatprep.subr.mxu0 0.0
    %552 = vmatpush1.msra.mxu0 0.0
    %553 = vmatprep.subr.mxu0 0.0
    %554 = vmatpush1.msra.mxu0 0.0
    %555 = vmatprep.subr.mxu0 0.0
    %556 = vmatpush1.msra.mxu0 0.0
    %557 = vmatprep.subr.mxu0 0.0
    %558 = vmatpush1.msra.mxu0 0.0
    %559 = vmatprep.subr.mxu0 0.0
    %560 = vmatpush1.msra.mxu0 0.0
    %561 = vmatprep.subr.mxu0 0.0
    %562 = vmatpush1.msra.mxu0 0.0
    %563 = vmatprep.subr.mxu0 0.0
    %564 = vmatpush1.msra.mxu0 0.0
    %565 = vmatprep.subr.mxu0 0.0
    %566 = vmatpush1.msra.mxu0 0.0
    %567 = vmatprep.subr.mxu0 0.0
    %568 = vmatpush1.msra.mxu0 0.0
    %569 = vmatprep.subr.mxu0 0.0
    %570 = vmatpush1.msra.mxu0 0.0
    %571 = vmatprep.subr.mxu0 0.0
    %572 = vmatpush1.msra.mxu0 0.0
    %573 = vmatprep.subr.mxu0 0.0
    %574 = vmatpush1.msra.mxu0 0.0
    %575 = vmatprep.subr.mxu0 0.0
    %576 = vmatpush1.msra.mxu0 %v540
    %577 = vmatprep.subr.mxu0 0.0
    %578 = vmatpush1.msra.mxu0 %v539
    %579 = vmatprep.subr.mxu0 0.0
    %580 = vmatpush1.msra.mxu0 %v538
    %581 = vmatprep.subr.mxu0 0.0
    %582 = vmatpush1.msra.mxu0 %v537
    %583 = vmatprep.subr.mxu0 0.0
    %584 = vmatpush2.msra.mxu0 0.0
    %585 = vmatprep.subr.mxu0 0.0
    %586 = vmatpush2.msra.mxu0 0.0
    %587 = vmatprep.subr.mxu0 0.0
    %588 = vmatpush2.msra.mxu0 0.0
    %589 = vmatprep.subr.mxu0 0.0
    %590 = vmatpush2.msra.mxu0 0.0
    %591 = vmatprep.subr.mxu0 0.0
    %592 = vmatpush2.msra.mxu0 0.0
    %593 = vmatprep.subr.mxu0 0.0
    %594 = vmatpush2.msra.mxu0 0.0
    %595 = vmatprep.subr.mxu0 0.0
    %596 = vmatpush2.msra.mxu0 0.0
    %597 = vmatprep.subr.mxu0 0.0
    %598 = vmatpush2.msra.mxu0 0.0
    %599 = vmatprep.subr.mxu0 0.0
    %600 = vmatpush2.msra.mxu0 0.0
    %601 = vmatprep.subr.mxu0 0.0
    %602 = vmatpush2.msra.mxu0 0.0
    %603 = vmatprep.subr.mxu0 0.0
    %604 = vmatpush2.msra.mxu0 0.0
    %605 = vmatprep.subr.mxu0 0.0
    %606 = vmatpush2.msra.mxu0 0.0
    %607 = vmatprep.subr.mxu0 0.0
    %608 = vmatpush2.msra.mxu0 0.0
    %609 = vmatprep.subr.mxu0 0.0
    %610 = vmatpush2.msra.mxu0 0.0
    %611 = vmatprep.subr.mxu0 0.0
    %612 = vmatpush2.msra.mxu0 0.0
    %613 = vmatprep.subr.mxu0 0.0
    %614 = vmatpush2.msra.mxu0 0.0
    %615 = vmatprep.mubr.f32.mxu0 0.0
    %616 = vmatmul.mubr.f32.gmra.mxu0 %v549
    %v617 = vpop.f32.mrf.mxu0
    %v618 = vadd.f32 %v546, %v617
    %v619 = vpop.f32.mrf.mxu0
    %620 = vdwg.mxu0
    %vm621 = vcmask 64512
    %622 = vst.msk [vmem:[#allocation2] sm:$0xff] %vm621, %v618
    // Predicated region
    $region30: #{tpu_custom_call.1} parent=1 // pred_check
      _
    $region31: #{tpu_custom_call.1} parent=1 // pred_check_branch
      %624 = sbr.rel (0) target = $region33
    $region32: #{tpu_custom_call.1} parent=1 // pred_region
      %s626 = ssub.s32 128, 128
      %627 = vsyncadd [#allocation3], %s626
      %s629 = sshll.u32 [#allocation2], 4
      %s630 = int_to_ptr.vmem [resolvable:$true] %s629
      %632 = dma.vmem_to_hbm [thread:$0]  %s630, 128, %s7, [#allocation3]
    $region33: #{tpu_custom_call.1} parent=1 // pred_fallthru
      _
    // Predicated region
    $region34: #{tpu_custom_call.1} parent=1 // pred_check
      _
    $region35: #{tpu_custom_call.1} parent=1 // pred_check_branch
      %634 = sbr.rel (0) target = $region37
    $region36: #{tpu_custom_call.1} parent=1 // pred_region
      %635 = dma.done [#allocation3], 128
    $region37: #{tpu_custom_call.1} parent=1 // pred_fallthru
      _
    %636 = vsyncpa [#allocation3], 1

</llo_original>
